<compile_context>
chip_gen: v7x
topology: tpu7x:2x2x1
jax: 0.10.0
libtpu: 0.0.40
codegen_flags: <defaults>
</compile_context>

<pallas_src>
import jax
import jax.numpy as jnp
from jax.experimental import pallas as pl
from jax.experimental.pallas import tpu as pltpu


def _build_kernel(n_views, has_mask, scale, bias, max_disparity):
    """Elementwise kernel processing one lane-dense row slab of every view per grid step."""
    scale = float(scale)
    bias = float(bias)
    n_in = sum(2 + int(hm) for hm in has_mask)

    def kernel(*refs):
        ins = refs[:n_in]
        outs = refs[n_in:]
        pos = 0
        for v in range(n_views):
            img_ref = ins[pos]
            disp_ref = ins[pos + 1]
            pos += 2
            mask_ref = None
            if has_mask[v]:
                mask_ref = ins[pos]
                pos += 1
            img_out_ref = outs[2 * v]
            valid_ref = outs[2 * v + 1]

            # ConvertImageDtype + Normalize fused into a single scale/bias (VPU).
            img = img_ref[...].astype(jnp.float32)
            img_out_ref[...] = img * scale + bias

            # MakeValidDisparityMask.
            d = disp_ref[...]
            ok = d > 0.0
            if max_disparity is not None:
                ok = jnp.logical_and(ok, d < float(max_disparity))
            if mask_ref is not None:
                ok = jnp.logical_and(ok, mask_ref[...] != 0)
            valid_ref[...] = ok.astype(jnp.int8)

    return kernel


def _fold_factor(H, W, max_lanes=2048):
    """Pick a divisor g of H to fold spatial rows into the lane dimension.

    Prefers the smallest g making W*g an exact multiple of 128 (fully unmasked
    vector stores); otherwise, when W < 128, falls back to the largest divisor
    under the lane cap so the lane dimension is at least wide."""
    best = 1
    for g in range(1, H + 1):
        if H % g or W * g > max_lanes:
            continue
        if (W * g) % 128 == 0:
            return g
        if W < 128 and W * g > W * best:
            best = g
    return best


def _pick_tile_rows(rows, lanes, C, n_views, img_itemsize, n_masks,
                    vmem_budget_bytes=8 * 1024 * 1024):
    """Largest row tile (multiple of 8, or full rows) whose double-buffered
    blocks fit the VMEM budget."""
    per_row = n_views * C * lanes * (img_itemsize + 4)   # image in + image out (f32)
    per_row += n_views * lanes * 4                        # disparity in (f32)
    per_row += n_masks * lanes                            # mask in (int8)
    per_row += n_views * lanes                            # valid out (int8)
    per_row *= 2                                          # double buffering
    tr = vmem_budget_bytes // max(per_row, 1)
    if tr >= rows:
        return rows
    return min(rows, max(8, (tr // 8) * 8))


def stereo_matching_eval_preset(images, disparities, masks=None, *,
                                mean=0.5, std=0.5, max_disparity=None,
                                tile_rows=None):
    """images/disparities/masks are (left, right) tuples, mirroring the PyTorch module."""
    images = tuple(images)
    disparities = tuple(disparities)
    n_views = len(images)
    if masks is None:
        masks = (None,) * n_views
    masks = tuple(masks)
    assert len(disparities) == n_views and len(masks) == n_views

    B, C, H, W = images[0].shape
    for img in images:
        assert img.shape == (B, C, H, W), "ValidateModelInput: image shape mismatch"
    for d in disparities:
        assert d.shape == (B, 1, H, W), "ValidateModelInput: disparity shape mismatch"
    for m in masks:
        assert m is None or m.shape == (B, 1, H, W), "ValidateModelInput: mask shape mismatch"
    has_mask = tuple(m is not None for m in masks)

    # ToTensor / ConvertImageDtype folded into the normalize scale & bias.
    img_dtype = images[0].dtype
    if jnp.issubdtype(img_dtype, jnp.integer):
        denom = float(jnp.iinfo(img_dtype).max)
    else:
        denom = 1.0
    scale = 1.0 / (denom * float(std))
    bias = -float(mean) / float(std)

    # Lane-dense folded views: (B, 1|C, H, W) -> (B, rows, W*g), g | H (free reshapes).
    g = _fold_factor(H, W)
    Lf = W * g               # lane width
    Rd = H // g              # disparity/mask/valid rows
    Ri = C * Rd              # image rows

    img_itemsize = jnp.dtype(img_dtype).itemsize
    TR = int(tile_rows) if tile_rows is not None else _pick_tile_rows(
        Rd, Lf, C, n_views, img_itemsize, sum(has_mask))
    TR = max(1, min(TR, Rd))
    n_t = pl.cdiv(Rd, TR)

    img_spec = pl.BlockSpec((1, C * TR, Lf), lambda b, t: (b, t, 0))
    row_spec = pl.BlockSpec((1, TR, Lf), lambda b, t: (b, t, 0))

    in_arrays, in_specs = [], []
    for v in range(n_views):
        in_arrays.append(images[v].reshape(B, Ri, Lf))
        in_specs.append(img_spec)
        in_arrays.append(disparities[v].reshape(B, Rd, Lf).astype(jnp.float32))
        in_specs.append(row_spec)
        if has_mask[v]:
            in_arrays.append(masks[v].reshape(B, Rd, Lf).astype(jnp.int8))
            in_specs.append(row_spec)

    out_shapes, out_specs = [], []
    for v in range(n_views):
        out_shapes.append(jax.ShapeDtypeStruct((B, Ri, Lf), jnp.float32))
        out_specs.append(img_spec)
        out_shapes.append(jax.ShapeDtypeStruct((B, Rd, Lf), jnp.int8))
        out_specs.append(row_spec)

    kernel = _build_kernel(n_views, has_mask, scale, bias, max_disparity)

    outs = pl.pallas_call(
        kernel,
        out_shape=tuple(out_shapes),
        grid_spec=pltpu.PrefetchScalarGridSpec(
            num_scalar_prefetch=0,
            grid=(B, n_t),
            in_specs=in_specs,
            out_specs=tuple(out_specs),
        ),
        compiler_params=pltpu.CompilerParams(
            dimension_semantics=("parallel", "parallel")),
    )(*in_arrays)

    out_images, out_disps, out_valids = [], [], []
    for v in range(n_views):
        out_images.append(outs[2 * v].reshape(B, C, H, W))
        # Disparity passes through unchanged: returned directly, no HBM round-trip.
        out_disps.append(disparities[v].astype(jnp.float32))
        # int8 -> bool is a cheap 1-byte cast kept outside the kernel
        # (avoids relying on i1 stores inside Mosaic).
        out_valids.append(outs[2 * v + 1].reshape(B, 1, H, W).astype(jnp.bool_))
    return tuple(out_images), tuple(out_disps), tuple(out_valids)


# TODO(synk): Resize(bilinear) / ConvertToGrayscale are only added when
# resize_size / use_grayscale are set; the default preset omits them, so they
# are not implemented here.


if __name__ == "__main__":
    key = jax.random.PRNGKey(0)
    k_il, k_ir, k_dl, k_dr, k_ml, k_mr = jax.random.split(key, 6)

    B, C, H, W = 2, 3, 16, 16
    img_l = jax.random.uniform(k_il, (B, C, H, W), dtype=jnp.float32)
    img_r = jax.random.uniform(k_ir, (B, C, H, W), dtype=jnp.float32)
    # disparities with some non-positive values so the mask logic is exercised
    disp_l = jax.random.uniform(k_dl, (B, 1, H, W), dtype=jnp.float32, minval=-2.0, maxval=8.0)
    disp_r = jax.random.uniform(k_dr, (B, 1, H, W), dtype=jnp.float32, minval=-2.0, maxval=8.0)
    mask_l = jax.random.bernoulli(k_ml, 0.8, (B, 1, H, W))
    mask_r = jax.random.bernoulli(k_mr, 0.8, (B, 1, H, W))

    # --- case 1: float32 images, both masks present, max_disparity=None ---
    (o_img_l, o_img_r), (o_d_l, o_d_r), (o_m_l, o_m_r) = stereo_matching_eval_preset(
        (img_l, img_r), (disp_l, disp_r), (mask_l, mask_r),
        mean=0.5, std=0.5, max_disparity=None)
    jax.block_until_ready((o_img_l, o_img_r, o_d_l, o_d_r, o_m_l, o_m_r))

    ref_img_l = (img_l - 0.5) / 0.5
    ref_img_r = (img_r - 0.5) / 0.5
    ref_m_l = jnp.logical_and(mask_l, disp_l > 0)
    ref_m_r = jnp.logical_and(mask_r, disp_r > 0)
    assert jnp.allclose(o_img_l, ref_img_l, atol=1e-6)
    assert jnp.allclose(o_img_r, ref_img_r, atol=1e-6)
    assert jnp.allclose(o_d_l, disp_l)
    assert jnp.allclose(o_d_r, disp_r)
    assert jnp.array_equal(o_m_l, ref_m_l)
    assert jnp.array_equal(o_m_r, ref_m_r)
    assert o_m_l.dtype == jnp.bool_

    # --- case 2: uint8 images, right mask missing, max_disparity set ---
    img_l_u8 = (img_l * 255.0).astype(jnp.uint8)
    img_r_u8 = (img_r * 255.0).astype(jnp.uint8)
    (u_img_l, u_img_r), _, (u_m_l, u_m_r) = stereo_matching_eval_preset(
        (img_l_u8, img_r_u8), (disp_l, disp_r), (mask_l, None),
        mean=0.5, std=0.5, max_disparity=4.0)
    jax.block_until_ready((u_img_l, u_img_r, u_m_l, u_m_r))

    ref_u_img_l = (img_l_u8.astype(jnp.float32) / 255.0 - 0.5) / 0.5
    ref_u_img_r = (img_r_u8.astype(jnp.float32) / 255.0 - 0.5) / 0.5
    ref_u_m_l = mask_l & (disp_l > 0) & (disp_l < 4.0)
    ref_u_m_r = (disp_r > 0) & (disp_r < 4.0)
    assert jnp.allclose(u_img_l, ref_u_img_l, atol=1e-5)
    assert jnp.allclose(u_img_r, ref_u_img_r, atol=1e-5)
    assert jnp.array_equal(u_m_l, ref_u_m_l)
    assert jnp.array_equal(u_m_r, ref_u_m_r)

    print("KERNEL_OK")
</pallas_src>

<mosaic_0001>
module attributes {stable_mosaic.version = 11 : i64} {
  func.func @kernel(%arg0: i32, %arg1: i32, %arg2: memref<1x6x128xf32, #tpu.memory_space<vmem>>, %arg3: memref<1x2x128xf32, #tpu.memory_space<vmem>>, %arg4: memref<1x2x128xi8, #tpu.memory_space<vmem>>, %arg5: memref<1x6x128xf32, #tpu.memory_space<vmem>>, %arg6: memref<1x2x128xf32, #tpu.memory_space<vmem>>, %arg7: memref<1x2x128xi8, #tpu.memory_space<vmem>>, %arg8: memref<1x6x128xf32, #tpu.memory_space<vmem>>, %arg9: memref<1x2x128xi8, #tpu.memory_space<vmem>>, %arg10: memref<1x6x128xf32, #tpu.memory_space<vmem>>, %arg11: memref<1x2x128xi8, #tpu.memory_space<vmem>>) attributes {dimension_semantics = [#tpu.dimension_semantics<parallel>, #tpu.dimension_semantics<parallel>], iteration_bounds = array<i64: 2, 1>, scalar_prefetch = 0 : i64, scratch_operands = 0 : i64, tpu.core_type = #tpu.core_type<tc>, window_params = [{transform_indices = @transform_0, window_bounds = array<i64: 1, 6, 128>}, {transform_indices = @transform_1, window_bounds = array<i64: 1, 2, 128>}, {transform_indices = @transform_2, window_bounds = array<i64: 1, 2, 128>}, {transform_indices = @transform_3, window_bounds = array<i64: 1, 6, 128>}, {transform_indices = @transform_4, window_bounds = array<i64: 1, 2, 128>}, {transform_indices = @transform_5, window_bounds = array<i64: 1, 2, 128>}, {transform_indices = @transform_6, window_bounds = array<i64: 1, 6, 128>}, {transform_indices = @transform_7, window_bounds = array<i64: 1, 2, 128>}, {transform_indices = @transform_8, window_bounds = array<i64: 1, 6, 128>}, {transform_indices = @transform_9, window_bounds = array<i64: 1, 2, 128>}]} {
    %c0 = arith.constant 0 : index
    %c0_0 = arith.constant 0 : index
    %c0_1 = arith.constant 0 : index
    %0 = vector.load %arg2[%c0, %c0_0, %c0_1] : memref<1x6x128xf32, #tpu.memory_space<vmem>>, vector<1x6x128xf32>
    %cst = arith.constant 2.000000e+00 : f32
    %1 = vector.broadcast %cst : f32 to vector<1x6x128xf32>
    %2 = arith.mulf %0, %1 : vector<1x6x128xf32>
    %cst_2 = arith.constant -1.000000e+00 : f32
    %3 = vector.broadcast %cst_2 : f32 to vector<1x6x128xf32>
    %4 = arith.addf %2, %3 : vector<1x6x128xf32>
    %c0_3 = arith.constant 0 : index
    %c0_4 = arith.constant 0 : index
    %c0_5 = arith.constant 0 : index
    %5 = vector.load %arg8[%c0_3, %c0_4, %c0_5] : memref<1x6x128xf32, #tpu.memory_space<vmem>>, vector<1x6x128xf32>
    tpu.vector_store %arg8[%c0_3, %c0_4, %c0_5], %4 {strides = array<i32>} : memref<1x6x128xf32, #tpu.memory_space<vmem>>, vector<1x6x128xf32>,
    %c0_6 = arith.constant 0 : index
    %c0_7 = arith.constant 0 : index
    %c0_8 = arith.constant 0 : index
    %6 = vector.load %arg3[%c0_6, %c0_7, %c0_8] : memref<1x2x128xf32, #tpu.memory_space<vmem>>, vector<1x2x128xf32>
    %cst_9 = arith.constant 0.000000e+00 : f32
    %7 = vector.broadcast %cst_9 : f32 to vector<1x2x128xf32>
    %8 = arith.cmpf ogt, %6, %7 : vector<1x2x128xf32>
    %c0_10 = arith.constant 0 : index
    %c0_11 = arith.constant 0 : index
    %c0_12 = arith.constant 0 : index
    %9 = vector.load %arg4[%c0_10, %c0_11, %c0_12] : memref<1x2x128xi8, #tpu.memory_space<vmem>>, vector<1x2x128xi8>
    %c0_i8 = arith.constant 0 : i8
    %10 = vector.broadcast %c0_i8 : i8 to vector<1x2x128xi8>
    %11 = arith.cmpi ne, %9, %10 : vector<1x2x128xi8>
    %12 = arith.andi %8, %11 : vector<1x2x128xi1>
    %13 = arith.extui %12 : vector<1x2x128xi1> to vector<1x2x128xi8>
    %c0_13 = arith.constant 0 : index
    %c0_14 = arith.constant 0 : index
    %c0_15 = arith.constant 0 : index
    %14 = vector.load %arg9[%c0_13, %c0_14, %c0_15] : memref<1x2x128xi8, #tpu.memory_space<vmem>>, vector<1x2x128xi8>
    tpu.vector_store %arg9[%c0_13, %c0_14, %c0_15], %13 {strides = array<i32>} : memref<1x2x128xi8, #tpu.memory_space<vmem>>, vector<1x2x128xi8>,
    %c0_16 = arith.constant 0 : index
    %c0_17 = arith.constant 0 : index
    %c0_18 = arith.constant 0 : index
    %15 = vector.load %arg5[%c0_16, %c0_17, %c0_18] : memref<1x6x128xf32, #tpu.memory_space<vmem>>, vector<1x6x128xf32>
    %cst_19 = arith.constant 2.000000e+00 : f32
    %16 = vector.broadcast %cst_19 : f32 to vector<1x6x128xf32>
    %17 = arith.mulf %15, %16 : vector<1x6x128xf32>
    %cst_20 = arith.constant -1.000000e+00 : f32
    %18 = vector.broadcast %cst_20 : f32 to vector<1x6x128xf32>
    %19 = arith.addf %17, %18 : vector<1x6x128xf32>
    %c0_21 = arith.constant 0 : index
    %c0_22 = arith.constant 0 : index
    %c0_23 = arith.constant 0 : index
    %20 = vector.load %arg10[%c0_21, %c0_22, %c0_23] : memref<1x6x128xf32, #tpu.memory_space<vmem>>, vector<1x6x128xf32>
    tpu.vector_store %arg10[%c0_21, %c0_22, %c0_23], %19 {strides = array<i32>} : memref<1x6x128xf32, #tpu.memory_space<vmem>>, vector<1x6x128xf32>,
    %c0_24 = arith.constant 0 : index
    %c0_25 = arith.constant 0 : index
    %c0_26 = arith.constant 0 : index
    %21 = vector.load %arg6[%c0_24, %c0_25, %c0_26] : memref<1x2x128xf32, #tpu.memory_space<vmem>>, vector<1x2x128xf32>
    %cst_27 = arith.constant 0.000000e+00 : f32
    %22 = vector.broadcast %cst_27 : f32 to vector<1x2x128xf32>
    %23 = arith.cmpf ogt, %21, %22 : vector<1x2x128xf32>
    %c0_28 = arith.constant 0 : index
    %c0_29 = arith.constant 0 : index
    %c0_30 = arith.constant 0 : index
    %24 = vector.load %arg7[%c0_28, %c0_29, %c0_30] : memref<1x2x128xi8, #tpu.memory_space<vmem>>, vector<1x2x128xi8>
    %c0_i8_31 = arith.constant 0 : i8
    %25 = vector.broadcast %c0_i8_31 : i8 to vector<1x2x128xi8>
    %26 = arith.cmpi ne, %24, %25 : vector<1x2x128xi8>
    %27 = arith.andi %23, %26 : vector<1x2x128xi1>
    %28 = arith.extui %27 : vector<1x2x128xi1> to vector<1x2x128xi8>
    %c0_32 = arith.constant 0 : index
    %c0_33 = arith.constant 0 : index
    %c0_34 = arith.constant 0 : index
    %29 = vector.load %arg11[%c0_32, %c0_33, %c0_34] : memref<1x2x128xi8, #tpu.memory_space<vmem>>, vector<1x2x128xi8>
    tpu.vector_store %arg11[%c0_32, %c0_33, %c0_34], %28 {strides = array<i32>} : memref<1x2x128xi8, #tpu.memory_space<vmem>>, vector<1x2x128xi8>,
    return
  }
  func.func @transform_0(%arg0: i32, %arg1: i32) -> (i32, i32, i32) {
    %c0_i32 = arith.constant 0 : i32
    %c0_i32_0 = arith.constant 0 : i32
    return %arg0, %arg1, %c0_i32 : i32, i32, i32
  }
  func.func @transform_1(%arg0: i32, %arg1: i32) -> (i32, i32, i32) {
    %c0_i32 = arith.constant 0 : i32
    %c0_i32_0 = arith.constant 0 : i32
    return %arg0, %arg1, %c0_i32 : i32, i32, i32
  }
  func.func @transform_2(%arg0: i32, %arg1: i32) -> (i32, i32, i32) {
    %c0_i32 = arith.constant 0 : i32
    %c0_i32_0 = arith.constant 0 : i32
    return %arg0, %arg1, %c0_i32 : i32, i32, i32
  }
  func.func @transform_3(%arg0: i32, %arg1: i32) -> (i32, i32, i32) {
    %c0_i32 = arith.constant 0 : i32
    %c0_i32_0 = arith.constant 0 : i32
    return %arg0, %arg1, %c0_i32 : i32, i32, i32
  }
  func.func @transform_4(%arg0: i32, %arg1: i32) -> (i32, i32, i32) {
    %c0_i32 = arith.constant 0 : i32
    %c0_i32_0 = arith.constant 0 : i32
    return %arg0, %arg1, %c0_i32 : i32, i32, i32
  }
  func.func @transform_5(%arg0: i32, %arg1: i32) -> (i32, i32, i32) {
    %c0_i32 = arith.constant 0 : i32
    %c0_i32_0 = arith.constant 0 : i32
    return %arg0, %arg1, %c0_i32 : i32, i32, i32
  }
  func.func @transform_6(%arg0: i32, %arg1: i32) -> (i32, i32, i32) {
    %c0_i32 = arith.constant 0 : i32
    %c0_i32_0 = arith.constant 0 : i32
    return %arg0, %arg1, %c0_i32 : i32, i32, i32
  }
  func.func @transform_7(%arg0: i32, %arg1: i32) -> (i32, i32, i32) {
    %c0_i32 = arith.constant 0 : i32
    %c0_i32_0 = arith.constant 0 : i32
    return %arg0, %arg1, %c0_i32 : i32, i32, i32
  }
  func.func @transform_8(%arg0: i32, %arg1: i32) -> (i32, i32, i32) {
    %c0_i32 = arith.constant 0 : i32
    %c0_i32_0 = arith.constant 0 : i32
    return %arg0, %arg1, %c0_i32 : i32, i32, i32
  }
  func.func @transform_9(%arg0: i32, %arg1: i32) -> (i32, i32, i32) {
    %c0_i32 = arith.constant 0 : i32
    %c0_i32_0 = arith.constant 0 : i32
    return %arg0, %arg1, %c0_i32 : i32, i32, i32
  }
}

</mosaic_0001>

<llo_original>
// kernel: tpu_custom_call.1
$region0: #{tpu_custom_call.1}
  #allocation0 [shape = 'u32[]', space=smem, size = 0x4, offset = 0x4, fixed_abs, tag = 'smem constant byte address 0x4 - core index']
  #allocation1 [shape = 'u32[144,128]{1,0:T(1,128)}', space=vmem, size = 0x12000, scoped, tag = 'internal scratch']
  %s0 = inlined_call_operand.vmem [shape: f32[2,6,128], index: 0, kind: input, shape index: {}]
  %s1 = inlined_call_operand.vmem [shape: f32[2,2,128], index: 1, kind: input, shape index: {}]
  %s2 = inlined_call_operand.vmem [shape: s8[2,2,128], index: 2, kind: input, shape index: {}]
  %s3 = inlined_call_operand.vmem [shape: f32[2,6,128], index: 3, kind: input, shape index: {}]
  %s4 = inlined_call_operand.vmem [shape: f32[2,2,128], index: 4, kind: input, shape index: {}]
  %s5 = inlined_call_operand.vmem [shape: s8[2,2,128], index: 5, kind: input, shape index: {}]
  %s6 = inlined_call_operand.vmem [shape: f32[2,6,128], index: 6, kind: output, shape index: {0}]
  %s7 = inlined_call_operand.hbm [shape: s8[2,2,128], index: 7, kind: output, shape index: {1}]
  %s8 = inlined_call_operand.vmem [shape: f32[2,6,128], index: 8, kind: output, shape index: {2}]
  %s9 = inlined_call_operand.hbm [shape: s8[2,2,128], index: 9, kind: output, shape index: {3}]
  %10 = xla_tuple %s6, %s7, %s8, %s9
  %s11 = sld [smem:[#allocation0]]
  $region81: #{tpu_custom_call.1} parent=0
    _
  %s13 = ssub.s32 1, %s11
  %s14 = scalar_select 0, %s13, %s11
  $region1: #{tpu_custom_call.1} parent=0
    #allocation2 [shape = 'u8[1024]{0}', space=vmem, size = 0x400, scoped, tag = 'output window, operand 1']
    #allocation3 [shape = 's32[2]{0}', space=sflag, size = 0x8, scoped, tag = 'scoped memory for tpu_custom_call.1']
    #allocation4 [shape = 'u8[1024]{0}', space=vmem, size = 0x400, scoped, tag = 'output window, operand 3']
    #allocation5 [shape = 's32[2]{0}', space=sflag, size = 0x8, scoped, tag = 'scoped memory for tpu_custom_call.1']
    %15 = vsyncpa [#allocation3], 0
    %s16 = scalar_lea.sflag [#allocation3], 1
    %17 = vsyncpa %s16, 0
    %18 = vsyncpa [#allocation5], 0
    %s19 = scalar_lea.sflag [#allocation5], 1
    %20 = vsyncpa %s19, 0
    loop: start=0, step=1, limit=4
    $region2: #{tpu_custom_call.1} parent=1 // loop_pre_header
      _
    $region3: #{tpu_custom_call.1} parent=1 // loop_header
      %s22 = sphi 0, %s26
      %p23 = scmp.ge.s32.totalorder %s22, 4
      %s29 = sphi 0, %s41
      %s30 = sphi 0, %s37
      %s31 = sphi 0, %s29
      %s32 = sphi 0, %s30
      %s33 = sphi 0, %s31
      %s34 = sphi 0, %s32
      %s46 = sphi 0, %s48
      %s49 = sphi 0, %s46
      %s50 = sphi 0, %s49
      %s66 = sphi 0, %s50
      %s74 = sphi 0, %s76
      %s77 = sphi 0, %s74
      %s78 = sphi 0, %s77
      %s94 = sphi 0, %s78
      %s102 = sphi 0, %s104
      %s105 = sphi 0, %s102
      %s106 = sphi 0, %s105
      %s122 = sphi 0, %s106
      %s130 = sphi 0, %s132
      %s133 = sphi 0, %s130
      %s134 = sphi 0, %s133
      %s150 = sphi 0, %s134
      %s158 = sphi 0, %s160
      %s161 = sphi 0, %s158
      %s162 = sphi 0, %s161
      %s178 = sphi 0, %s162
      %s186 = sphi 0, %s188
      %s189 = sphi 0, %s186
      %s190 = sphi 0, %s189
      %s206 = sphi 0, %s190
      %s214 = sphi 0, %s216
      %s217 = sphi 0, %s214
      %s218 = sphi 0, %s217
      %s234 = sphi 0, %s218
      %s242 = sphi 0, %s244
      %s245 = sphi 0, %s242
      %s246 = sphi 0, %s245
      %s262 = sphi 0, %s246
      %s270 = sphi 0, %s272
      %s273 = sphi 0, %s270
      %s274 = sphi 0, %s273
      %s290 = sphi 0, %s274
      %s298 = sphi 0, %s300
      %s301 = sphi 0, %s298
      %s302 = sphi 0, %s301
      %s318 = sphi 0, %s302
    $region4: #{tpu_custom_call.1} parent=1 // loop_header_branch
      %25 = sbr.rel (%p23) target = $region8
    $region5: #{tpu_custom_call.1} parent=1 // loop_body
      %s27 = ssub.s32 %s22, 1
      %s28 = ssub.s32 %s22, 2
      %s35 = sadd.s32 1, %s30
      %p36 = scmp.ge.s32.totalorder %s35, 1
      %s37 = scalar_select %p36, 0, %s35
      %s38 = sadd.s32 1, %s29
      %s39 = scalar_select %p36, %s38, %s29
      %p40 = scmp.ge.s32.totalorder %s39, 2
      %s41 = scalar_select %p40, 0, %s39
      %s42 = ssub.s32 %s29, %s41
      %s43 = ssub.s32 %s30, %s37
      %s44 = sor.u32 %s42, %s43
      %p45 = scmp.eq.s32.totalorder %s44, 0
      %s47 = sadd.s32 %s46, 1
      %s48 = scalar_select %p45, %s46, %s47
      %p51 = pneg %p45
      %p52 = scmp.eq.s32.totalorder %s22, 1
      %p53 = por %p51, %p52
      %p54 = scmp.ne.s32.totalorder %s46, %s49
      %p55 = scmp.eq.s32.totalorder %s22, 0
      %p56 = por %p54, %p55
      %p57 = scmp.ne.s32.totalorder %s46, %s49
      %p58 = scmp.eq.s32.totalorder %s27, 1
      %p59 = por %p57, %p58
      %p60 = scmp.ne.s32.totalorder %s49, %s50
      %p61 = scmp.eq.s32.totalorder %s27, 0
      %p62 = por %p60, %p61
      %p63 = scmp.ne.s32.totalorder %s49, %s50
      %p64 = scmp.eq.s32.totalorder %s28, 1
      %p65 = por %p63, %p64
      %p67 = scmp.ne.s32.totalorder %s50, %s66
      %p68 = scmp.eq.s32.totalorder %s28, 0
      %p69 = por %p67, %p68
      %s70 = ssub.s32 %s29, %s41
      %s71 = ssub.s32 %s30, %s37
      %s72 = sor.u32 %s70, %s71
      %p73 = scmp.eq.s32.totalorder %s72, 0
      %s75 = sadd.s32 %s74, 1
      %s76 = scalar_select %p73, %s74, %s75
      %p79 = pneg %p73
      %p80 = scmp.eq.s32.totalorder %s22, 1
      %p81 = por %p79, %p80
      %p82 = scmp.ne.s32.totalorder %s74, %s77
      %p83 = scmp.eq.s32.totalorder %s22, 0
      %p84 = por %p82, %p83
      %p85 = scmp.ne.s32.totalorder %s74, %s77
      %p86 = scmp.eq.s32.totalorder %s27, 1
      %p87 = por %p85, %p86
      %p88 = scmp.ne.s32.totalorder %s77, %s78
      %p89 = scmp.eq.s32.totalorder %s27, 0
      %p90 = por %p88, %p89
      %p91 = scmp.ne.s32.totalorder %s77, %s78
      %p92 = scmp.eq.s32.totalorder %s28, 1
      %p93 = por %p91, %p92
      %p95 = scmp.ne.s32.totalorder %s78, %s94
      %p96 = scmp.eq.s32.totalorder %s28, 0
      %p97 = por %p95, %p96
      %s98 = ssub.s32 %s29, %s41
      %s99 = ssub.s32 %s30, %s37
      %s100 = sor.u32 %s98, %s99
      %p101 = scmp.eq.s32.totalorder %s100, 0
      %s103 = sadd.s32 %s102, 1
      %s104 = scalar_select %p101, %s102, %s103
      %p107 = pneg %p101
      %p108 = scmp.eq.s32.totalorder %s22, 1
      %p109 = por %p107, %p108
      %p110 = scmp.ne.s32.totalorder %s102, %s105
      %p111 = scmp.eq.s32.totalorder %s22, 0
      %p112 = por %p110, %p111
      %p113 = scmp.ne.s32.totalorder %s102, %s105
      %p114 = scmp.eq.s32.totalorder %s27, 1
      %p115 = por %p113, %p114
      %p116 = scmp.ne.s32.totalorder %s105, %s106
      %p117 = scmp.eq.s32.totalorder %s27, 0
      %p118 = por %p116, %p117
      %p119 = scmp.ne.s32.totalorder %s105, %s106
      %p120 = scmp.eq.s32.totalorder %s28, 1
      %p121 = por %p119, %p120
      %p123 = scmp.ne.s32.totalorder %s106, %s122
      %p124 = scmp.eq.s32.totalorder %s28, 0
      %p125 = por %p123, %p124
      %s126 = ssub.s32 %s29, %s41
      %s127 = ssub.s32 %s30, %s37
      %s128 = sor.u32 %s126, %s127
      %p129 = scmp.eq.s32.totalorder %s128, 0
      %s131 = sadd.s32 %s130, 1
      %s132 = scalar_select %p129, %s130, %s131
      %p135 = pneg %p129
      %p136 = scmp.eq.s32.totalorder %s22, 1
      %p137 = por %p135, %p136
      %p138 = scmp.ne.s32.totalorder %s130, %s133
      %p139 = scmp.eq.s32.totalorder %s22, 0
      %p140 = por %p138, %p139
      %p141 = scmp.ne.s32.totalorder %s130, %s133
      %p142 = scmp.eq.s32.totalorder %s27, 1
      %p143 = por %p141, %p142
      %p144 = scmp.ne.s32.totalorder %s133, %s134
      %p145 = scmp.eq.s32.totalorder %s27, 0
      %p146 = por %p144, %p145
      %p147 = scmp.ne.s32.totalorder %s133, %s134
      %p148 = scmp.eq.s32.totalorder %s28, 1
      %p149 = por %p147, %p148
      %p151 = scmp.ne.s32.totalorder %s134, %s150
      %p152 = scmp.eq.s32.totalorder %s28, 0
      %p153 = por %p151, %p152
      %s154 = ssub.s32 %s29, %s41
      %s155 = ssub.s32 %s30, %s37
      %s156 = sor.u32 %s154, %s155
      %p157 = scmp.eq.s32.totalorder %s156, 0
      %s159 = sadd.s32 %s158, 1
      %s160 = scalar_select %p157, %s158, %s159
      %p163 = pneg %p157
      %p164 = scmp.eq.s32.totalorder %s22, 1
      %p165 = por %p163, %p164
      %p166 = scmp.ne.s32.totalorder %s158, %s161
      %p167 = scmp.eq.s32.totalorder %s22, 0
      %p168 = por %p166, %p167
      %p169 = scmp.ne.s32.totalorder %s158, %s161
      %p170 = scmp.eq.s32.totalorder %s27, 1
      %p171 = por %p169, %p170
      %p172 = scmp.ne.s32.totalorder %s161, %s162
      %p173 = scmp.eq.s32.totalorder %s27, 0
      %p174 = por %p172, %p173
      %p175 = scmp.ne.s32.totalorder %s161, %s162
      %p176 = scmp.eq.s32.totalorder %s28, 1
      %p177 = por %p175, %p176
      %p179 = scmp.ne.s32.totalorder %s162, %s178
      %p180 = scmp.eq.s32.totalorder %s28, 0
      %p181 = por %p179, %p180
      %s182 = ssub.s32 %s29, %s41
      %s183 = ssub.s32 %s30, %s37
      %s184 = sor.u32 %s182, %s183
      %p185 = scmp.eq.s32.totalorder %s184, 0
      %s187 = sadd.s32 %s186, 1
      %s188 = scalar_select %p185, %s186, %s187
      %p191 = pneg %p185
      %p192 = scmp.eq.s32.totalorder %s22, 1
      %p193 = por %p191, %p192
      %p194 = scmp.ne.s32.totalorder %s186, %s189
      %p195 = scmp.eq.s32.totalorder %s22, 0
      %p196 = por %p194, %p195
      %p197 = scmp.ne.s32.totalorder %s186, %s189
      %p198 = scmp.eq.s32.totalorder %s27, 1
      %p199 = por %p197, %p198
      %p200 = scmp.ne.s32.totalorder %s189, %s190
      %p201 = scmp.eq.s32.totalorder %s27, 0
      %p202 = por %p200, %p201
      %p203 = scmp.ne.s32.totalorder %s189, %s190
      %p204 = scmp.eq.s32.totalorder %s28, 1
      %p205 = por %p203, %p204
      %p207 = scmp.ne.s32.totalorder %s190, %s206
      %p208 = scmp.eq.s32.totalorder %s28, 0
      %p209 = por %p207, %p208
      %s210 = ssub.s32 %s29, %s41
      %s211 = ssub.s32 %s30, %s37
      %s212 = sor.u32 %s210, %s211
      %p213 = scmp.eq.s32.totalorder %s212, 0
      %s215 = sadd.s32 %s214, 1
      %s216 = scalar_select %p213, %s214, %s215
      %p219 = pneg %p213
      %p220 = scmp.eq.s32.totalorder %s22, 1
      %p221 = por %p219, %p220
      %p222 = scmp.ne.s32.totalorder %s214, %s217
      %p223 = scmp.eq.s32.totalorder %s22, 0
      %p224 = por %p222, %p223
      %p225 = scmp.ne.s32.totalorder %s214, %s217
      %p226 = scmp.eq.s32.totalorder %s27, 1
      %p227 = por %p225, %p226
      %p228 = scmp.ne.s32.totalorder %s217, %s218
      %p229 = scmp.eq.s32.totalorder %s27, 0
      %p230 = por %p228, %p229
      %p231 = scmp.ne.s32.totalorder %s217, %s218
      %p232 = scmp.eq.s32.totalorder %s28, 1
      %p233 = por %p231, %p232
      %p235 = scmp.ne.s32.totalorder %s218, %s234
      %p236 = scmp.eq.s32.totalorder %s28, 0
      %p237 = por %p235, %p236
      %s238 = ssub.s32 %s29, %s41
      %s239 = ssub.s32 %s30, %s37
      %s240 = sor.u32 %s238, %s239
      %p241 = scmp.eq.s32.totalorder %s240, 0
      %s243 = sadd.s32 %s242, 1
      %s244 = scalar_select %p241, %s242, %s243
      %p247 = pneg %p241
      %p248 = scmp.eq.s32.totalorder %s22, 1
      %p249 = por %p247, %p248
      %p250 = scmp.ne.s32.totalorder %s242, %s245
      %p251 = scmp.eq.s32.totalorder %s22, 0
      %p252 = por %p250, %p251
      %p253 = scmp.ne.s32.totalorder %s242, %s245
      %p254 = scmp.eq.s32.totalorder %s27, 1
      %p255 = por %p253, %p254
      %p256 = scmp.ne.s32.totalorder %s245, %s246
      %p257 = scmp.eq.s32.totalorder %s27, 0
      %p258 = por %p256, %p257
      %p259 = scmp.ne.s32.totalorder %s245, %s246
      %p260 = scmp.eq.s32.totalorder %s28, 1
      %p261 = por %p259, %p260
      %p263 = scmp.ne.s32.totalorder %s246, %s262
      %p264 = scmp.eq.s32.totalorder %s28, 0
      %p265 = por %p263, %p264
      %s266 = ssub.s32 %s29, %s41
      %s267 = ssub.s32 %s30, %s37
      %s268 = sor.u32 %s266, %s267
      %p269 = scmp.eq.s32.totalorder %s268, 0
      %s271 = sadd.s32 %s270, 1
      %s272 = scalar_select %p269, %s270, %s271
      %p275 = pneg %p269
      %p276 = scmp.eq.s32.totalorder %s22, 1
      %p277 = por %p275, %p276
      %p278 = scmp.ne.s32.totalorder %s270, %s273
      %p279 = scmp.eq.s32.totalorder %s22, 0
      %p280 = por %p278, %p279
      %p281 = scmp.ne.s32.totalorder %s270, %s273
      %p282 = scmp.eq.s32.totalorder %s27, 1
      %p283 = por %p281, %p282
      %p284 = scmp.ne.s32.totalorder %s273, %s274
      %p285 = scmp.eq.s32.totalorder %s27, 0
      %p286 = por %p284, %p285
      %p287 = scmp.ne.s32.totalorder %s273, %s274
      %p288 = scmp.eq.s32.totalorder %s28, 1
      %p289 = por %p287, %p288
      %p291 = scmp.ne.s32.totalorder %s274, %s290
      %p292 = scmp.eq.s32.totalorder %s28, 0
      %p293 = por %p291, %p292
      %s294 = ssub.s32 %s29, %s41
      %s295 = ssub.s32 %s30, %s37
      %s296 = sor.u32 %s294, %s295
      %p297 = scmp.eq.s32.totalorder %s296, 0
      %s299 = sadd.s32 %s298, 1
      %s300 = scalar_select %p297, %s298, %s299
      %p303 = pneg %p297
      %p304 = scmp.eq.s32.totalorder %s22, 1
      %p305 = por %p303, %p304
      %p306 = scmp.ne.s32.totalorder %s298, %s301
      %p307 = scmp.eq.s32.totalorder %s22, 0
      %p308 = por %p306, %p307
      %p309 = scmp.ne.s32.totalorder %s298, %s301
      %p310 = scmp.eq.s32.totalorder %s27, 1
      %p311 = por %p309, %p310
      %p312 = scmp.ne.s32.totalorder %s301, %s302
      %p313 = scmp.eq.s32.totalorder %s27, 0
      %p314 = por %p312, %p313
      %p315 = scmp.ne.s32.totalorder %s301, %s302
      %p316 = scmp.eq.s32.totalorder %s28, 1
      %p317 = por %p315, %p316
      %p319 = scmp.ne.s32.totalorder %s302, %s318
      %p320 = scmp.eq.s32.totalorder %s28, 0
      %p321 = por %p319, %p320
      %p322 = scmp.le.s32.totalorder 1, %s22
      %p323 = scmp.lt.s32.totalorder %s22, 3
      %p324 = pnand %p322, %p323
      %p325 = pneg %p324
      // Predicated region
      $region9: #{tpu_custom_call.1} parent=5 // pred_check
        _
      $region10: #{tpu_custom_call.1} parent=5 // pred_check_branch
        %327 = sbr.rel (%p324) target = $region12
      $region11: #{tpu_custom_call.1} parent=5 // pred_region
        %s328 = ssub.s32 %s22, 1
      $region12: #{tpu_custom_call.1} parent=5 // pred_fallthru
        _
      %p329 = scmp.lt.s32.totalorder %s22, 2
      // Predicated region
      $region13: #{tpu_custom_call.1} parent=5 // pred_check
        %p330 = pneg %p329
      $region14: #{tpu_custom_call.1} parent=5 // pred_check_branch
        %332 = sbr.rel (%p330) target = $region16
      $region15: #{tpu_custom_call.1} parent=5 // pred_region
        // Predicated region
        $region17: #{tpu_custom_call.1} parent=15 // pred_check
          %p333 = pneg %p56
        $region18: #{tpu_custom_call.1} parent=15 // pred_check_branch
          %335 = sbr.rel (%p333) target = $region20
        $region19: #{tpu_custom_call.1} parent=15 // pred_region
          %p336 = scmp.lt.s32.totalorder %s29, 1
          %s337 = scalar_select %p336, %s29, 1
          %p338 = scmp.lt.s32.totalorder %s30, 0
          %s339 = scalar_select %p338, %s30, 0
          %s340 = sadd.s32 %s339, %s337
          %s341 = smul.addr %s340, 8
          %s342 = scalar_lea.vmem %s0, %s341
        $region20: #{tpu_custom_call.1} parent=15 // pred_fallthru
          _
        // Predicated region
        $region21: #{tpu_custom_call.1} parent=15 // pred_check
          %p343 = pneg %p84
        $region22: #{tpu_custom_call.1} parent=15 // pred_check_branch
          %345 = sbr.rel (%p343) target = $region24
        $region23: #{tpu_custom_call.1} parent=15 // pred_region
          %p346 = scmp.lt.s32.totalorder %s29, 1
          %s347 = scalar_select %p346, %s29, 1
          %p348 = scmp.lt.s32.totalorder %s30, 0
          %s349 = scalar_select %p348, %s30, 0
          %s350 = sadd.s32 %s349, %s347
          %s351 = smul.addr %s350, 2
          %s352 = scalar_lea.vmem %s1, %s351
        $region24: #{tpu_custom_call.1} parent=15 // pred_fallthru
          _
        // Predicated region
        $region25: #{tpu_custom_call.1} parent=15 // pred_check
          %p353 = pneg %p112
        $region26: #{tpu_custom_call.1} parent=15 // pred_check_branch
          %355 = sbr.rel (%p353) target = $region28
        $region27: #{tpu_custom_call.1} parent=15 // pred_region
          %p356 = scmp.lt.s32.totalorder %s29, 1
          %s357 = scalar_select %p356, %s29, 1
          %p358 = scmp.lt.s32.totalorder %s30, 0
          %s359 = scalar_select %p358, %s30, 0
          %s360 = sadd.s32 %s359, %s357
          %s361 = scalar_lea.vmem %s2, %s360
        $region28: #{tpu_custom_call.1} parent=15 // pred_fallthru
          _
        // Predicated region
        $region29: #{tpu_custom_call.1} parent=15 // pred_check
          %p362 = pneg %p140
        $region30: #{tpu_custom_call.1} parent=15 // pred_check_branch
          %364 = sbr.rel (%p362) target = $region32
        $region31: #{tpu_custom_call.1} parent=15 // pred_region
          %p365 = scmp.lt.s32.totalorder %s29, 1
          %s366 = scalar_select %p365, %s29, 1
          %p367 = scmp.lt.s32.totalorder %s30, 0
          %s368 = scalar_select %p367, %s30, 0
          %s369 = sadd.s32 %s368, %s366
          %s370 = smul.addr %s369, 8
          %s371 = scalar_lea.vmem %s3, %s370
        $region32: #{tpu_custom_call.1} parent=15 // pred_fallthru
          _
        // Predicated region
        $region33: #{tpu_custom_call.1} parent=15 // pred_check
          %p372 = pneg %p168
        $region34: #{tpu_custom_call.1} parent=15 // pred_check_branch
          %374 = sbr.rel (%p372) target = $region36
        $region35: #{tpu_custom_call.1} parent=15 // pred_region
          %p375 = scmp.lt.s32.totalorder %s29, 1
          %s376 = scalar_select %p375, %s29, 1
          %p377 = scmp.lt.s32.totalorder %s30, 0
          %s378 = scalar_select %p377, %s30, 0
          %s379 = sadd.s32 %s378, %s376
          %s380 = smul.addr %s379, 2
          %s381 = scalar_lea.vmem %s4, %s380
        $region36: #{tpu_custom_call.1} parent=15 // pred_fallthru
          _
        // Predicated region
        $region37: #{tpu_custom_call.1} parent=15 // pred_check
          %p382 = pneg %p196
        $region38: #{tpu_custom_call.1} parent=15 // pred_check_branch
          %384 = sbr.rel (%p382) target = $region40
        $region39: #{tpu_custom_call.1} parent=15 // pred_region
          %p385 = scmp.lt.s32.totalorder %s29, 1
          %s386 = scalar_select %p385, %s29, 1
          %p387 = scmp.lt.s32.totalorder %s30, 0
          %s388 = scalar_select %p387, %s30, 0
          %s389 = sadd.s32 %s388, %s386
          %s390 = scalar_lea.vmem %s5, %s389
        $region40: #{tpu_custom_call.1} parent=15 // pred_fallthru
          _
      $region16: #{tpu_custom_call.1} parent=5 // pred_fallthru
        _
      %p391 = scmp.le.s32.totalorder 1, %s22
      %p392 = scmp.lt.s32.totalorder %s22, 3
      %p393 = pnand %p391, %p392
      %p394 = pneg %p393
      // Predicated region
      $region41: #{tpu_custom_call.1} parent=5 // pred_check
        _
      $region42: #{tpu_custom_call.1} parent=5 // pred_check_branch
        %396 = sbr.rel (%p393) target = $region44
      $region43: #{tpu_custom_call.1} parent=5 // pred_region
        %s397 = ssub.s32 %s22, 1
        %p398 = scmp.lt.s32.totalorder %s31, 1
        %s399 = scalar_select %p398, %s31, 1
        %p400 = scmp.lt.s32.totalorder %s32, 0
        %s401 = scalar_select %p400, %s32, 0
        %s402 = sadd.s32 %s401, %s399
        %s403 = smul.addr %s402, 8
        %s404 = scalar_lea.vmem %s0, %s403
        %p405 = pneg %p62
        %p406 = pneg %p59
        %p407 = scmp.lt.s32.totalorder %s31, 1
        %s408 = scalar_select %p407, %s31, 1
        %p409 = scmp.lt.s32.totalorder %s32, 0
        %s410 = scalar_select %p409, %s32, 0
        %s411 = sadd.s32 %s410, %s408
        %s412 = smul.addr %s411, 2
        %s413 = scalar_lea.vmem %s1, %s412
        %p414 = pneg %p90
        %p415 = pneg %p87
        %p416 = scmp.lt.s32.totalorder %s31, 1
        %s417 = scalar_select %p416, %s31, 1
        %p418 = scmp.lt.s32.totalorder %s32, 0
        %s419 = scalar_select %p418, %s32, 0
        %s420 = sadd.s32 %s419, %s417
        %s421 = scalar_lea.vmem %s2, %s420
        %p422 = pneg %p118
        %p423 = pneg %p115
        %p424 = scmp.lt.s32.totalorder %s31, 1
        %s425 = scalar_select %p424, %s31, 1
        %p426 = scmp.lt.s32.totalorder %s32, 0
        %s427 = scalar_select %p426, %s32, 0
        %s428 = sadd.s32 %s427, %s425
        %s429 = smul.addr %s428, 8
        %s430 = scalar_lea.vmem %s3, %s429
        %p431 = pneg %p146
        %p432 = pneg %p143
        %p433 = scmp.lt.s32.totalorder %s31, 1
        %s434 = scalar_select %p433, %s31, 1
        %p435 = scmp.lt.s32.totalorder %s32, 0
        %s436 = scalar_select %p435, %s32, 0
        %s437 = sadd.s32 %s436, %s434
        %s438 = smul.addr %s437, 2
        %s439 = scalar_lea.vmem %s4, %s438
        %p440 = pneg %p174
        %p441 = pneg %p171
        %p442 = scmp.lt.s32.totalorder %s31, 1
        %s443 = scalar_select %p442, %s31, 1
        %p444 = scmp.lt.s32.totalorder %s32, 0
        %s445 = scalar_select %p444, %s32, 0
        %s446 = sadd.s32 %s445, %s443
        %s447 = scalar_lea.vmem %s5, %s446
        %p448 = pneg %p202
        %p449 = pneg %p199
        %p450 = pneg %p230
        %p451 = pneg %p227
        %p452 = scmp.lt.s32.totalorder %s31, 1
        %s453 = scalar_select %p452, %s31, 1
        %p454 = scmp.lt.s32.totalorder %s32, 0
        %s455 = scalar_select %p454, %s32, 0
        %s456 = sadd.s32 %s455, %s453
        %s457 = smul.addr %s456, 8
        %s458 = scalar_lea.vmem %s6, %s457
        %p459 = pneg %p258
        %p460 = pneg %p255
        %s461 = sand.u32 %s245, 1
        %s462 = scalar_lea.sflag [#allocation3], %s461
        %s463 = sand.u32 %s245, 1
        %s464 = scalar_lea.vmem [#allocation2], %s463
        %p465 = pneg %p286
        %p466 = pneg %p283
        %p467 = scmp.lt.s32.totalorder %s31, 1
        %s468 = scalar_select %p467, %s31, 1
        %p469 = scmp.lt.s32.totalorder %s32, 0
        %s470 = scalar_select %p469, %s32, 0
        %s471 = sadd.s32 %s470, %s468
        %s472 = smul.addr %s471, 8
        %s473 = scalar_lea.vmem %s8, %s472
        %p474 = pneg %p314
        %p475 = pneg %p311
        %s476 = sand.u32 %s301, 1
        %s477 = scalar_lea.sflag [#allocation5], %s476
        %s478 = sand.u32 %s301, 1
        %s479 = scalar_lea.vmem [#allocation4], %s478
        %p480 = scmp.lt.s32.totalorder %s31, 1
        %s481 = scalar_select %p480, %s31, 1
        %p482 = scmp.lt.s32.totalorder %s32, 0
        %s483 = scalar_select %p482, %s32, 0
        %s484 = sadd.s32 %s483, %s481
        %s485 = smul.addr %s484, 8
        %s486 = scalar_lea.vmem %s0, %s485
        %p487 = scmp.lt.s32.totalorder %s31, 1
        %s488 = scalar_select %p487, %s31, 1
        %p489 = scmp.lt.s32.totalorder %s32, 0
        %s490 = scalar_select %p489, %s32, 0
        %s491 = sadd.s32 %s490, %s488
        %s492 = smul.addr %s491, 2
        %s493 = scalar_lea.vmem %s1, %s492
        %p494 = scmp.lt.s32.totalorder %s31, 1
        %s495 = scalar_select %p494, %s31, 1
        %p496 = scmp.lt.s32.totalorder %s32, 0
        %s497 = scalar_select %p496, %s32, 0
        %s498 = sadd.s32 %s497, %s495
        %s499 = scalar_lea.vmem %s2, %s498
        %p500 = scmp.lt.s32.totalorder %s31, 1
        %s501 = scalar_select %p500, %s31, 1
        %p502 = scmp.lt.s32.totalorder %s32, 0
        %s503 = scalar_select %p502, %s32, 0
        %s504 = sadd.s32 %s503, %s501
        %s505 = smul.addr %s504, 8
        %s506 = scalar_lea.vmem %s3, %s505
        %p507 = scmp.lt.s32.totalorder %s31, 1
        %s508 = scalar_select %p507, %s31, 1
        %p509 = scmp.lt.s32.totalorder %s32, 0
        %s510 = scalar_select %p509, %s32, 0
        %s511 = sadd.s32 %s510, %s508
        %s512 = smul.addr %s511, 2
        %s513 = scalar_lea.vmem %s4, %s512
        %p514 = scmp.lt.s32.totalorder %s31, 1
        %s515 = scalar_select %p514, %s31, 1
        %p516 = scmp.lt.s32.totalorder %s32, 0
        %s517 = scalar_select %p516, %s32, 0
        %s518 = sadd.s32 %s517, %s515
        %s519 = scalar_lea.vmem %s5, %s518
        %p520 = scmp.lt.s32.totalorder %s31, 1
        %s521 = scalar_select %p520, %s31, 1
        %p522 = scmp.lt.s32.totalorder %s32, 0
        %s523 = scalar_select %p522, %s32, 0
        %s524 = sadd.s32 %s523, %s521
        %s525 = smul.addr %s524, 8
        %s526 = scalar_lea.vmem %s6, %s525
        %p527 = scmp.lt.s32.totalorder %s31, 1
        %s528 = scalar_select %p527, %s31, 1
        %p529 = scmp.lt.s32.totalorder %s32, 0
        %s530 = scalar_select %p529, %s32, 0
        %s531 = sadd.s32 %s530, %s528
        %s532 = smul.addr %s531, 8
        %s533 = scalar_lea.vmem %s8, %s532
        %v536 = vld [vmem:[%s486] sm:$0x3f]
        %v537 = vmul.f32 %v536, 2.0
        %v538 = vadd.f32 %v537, -1.0
        %539 = vst [vmem:[%s526] sm:$0x3f] %v538
        %v540 = vld [vmem:[%s493] sm:$0x3]
        %vm541 = vcmp.gt.f32.partialorder %v540, 0.0
        %v542 = vld [vmem:[%s499] sm:$0x1]
        %vm543 = vnez %v542
        %v544 = vsel %vm543, 16843009, 0
        %v545 = vunpack.c.0.s8 %v544
        %vm546 = vcmp.ne.s32.totalorder %v545, 0
        %vm547 = vmand %vm541, %vm546
        %vm548 = vmpackc.low %vm547, %vm547
        %vm549 = vmpackc.even %vm548, %vm548
        %v550 = vsel %vm549, 16843009, 0
        %vm551 = vcmask 1040384
        %vm552 = vsmask.f32 256
        %vm553 = vmand %vm551, %vm552
        %v554 = vld [vmem:[%s464] sm:$0x1]
        %v555 = vsel %vm553, %v550, %v554
        %556 = vst [vmem:[%s464] sm:$0x1] %v555
        %v557 = vld [vmem:[%s506] sm:$0x3f]
        %v558 = vmul.f32 %v557, 2.0
        %v559 = vadd.f32 %v558, -1.0
        %560 = vst [vmem:[%s533] sm:$0x3f] %v559
        %v561 = vld [vmem:[%s513] sm:$0x3]
        %vm562 = vcmp.gt.f32.partialorder %v561, 0.0
        %v563 = vld [vmem:[%s519] sm:$0x1]
        %vm564 = vnez %v563
        %v565 = vsel %vm564, 16843009, 0
        %v566 = vunpack.c.0.s8 %v565
        %vm567 = vcmp.ne.s32.totalorder %v566, 0
        %vm568 = vmand %vm562, %vm567
        %vm569 = vmpackc.low %vm568, %vm568
        %vm570 = vmpackc.even %vm569, %vm569
        %v571 = vsel %vm570, 16843009, 0
        %v572 = vld [vmem:[%s479] sm:$0x1]
        %v573 = vsel %vm553, %v571, %v572
        %574 = vst [vmem:[%s479] sm:$0x1] %v573
        %p575 = scmp.lt.s32.totalorder %s31, 1
        %s576 = scalar_select %p575, %s31, 1
        %p577 = scmp.lt.s32.totalorder %s32, 0
        %s578 = scalar_select %p577, %s32, 0
        %s579 = sadd.s32 %s578, %s576
        %s580 = smul.addr %s579, 8
        %s581 = scalar_lea.vmem %s6, %s580
        %s582 = sand.u32 %s245, 1
        %s583 = scalar_lea.sflag [#allocation3], %s582
        %s584 = sand.u32 %s245, 1
        %s585 = scalar_lea.vmem [#allocation2], %s584
        %p586 = scmp.lt.s32.totalorder %s31, 1
        %s587 = scalar_select %p586, %s31, 1
        %p588 = scmp.lt.s32.totalorder %s32, 0
        %s589 = scalar_select %p588, %s32, 0
        %s590 = sadd.s32 %s589, %s587
        %s591 = smul.addr %s590, 8
        %s592 = scalar_lea.vmem %s8, %s591
        %s593 = sand.u32 %s301, 1
        %s594 = scalar_lea.sflag [#allocation5], %s593
        %s595 = sand.u32 %s301, 1
        %s596 = scalar_lea.vmem [#allocation4], %s595
        // Predicated region
        $region45: #{tpu_custom_call.1} parent=43 // pred_check
          %p597 = pneg %p227
        $region46: #{tpu_custom_call.1} parent=43 // pred_check_branch
          %599 = sbr.rel (%p597) target = $region48
        $region47: #{tpu_custom_call.1} parent=43 // pred_region
          _
        $region48: #{tpu_custom_call.1} parent=43 // pred_fallthru
          _
        // Predicated region
        $region49: #{tpu_custom_call.1} parent=43 // pred_check
          %p600 = pneg %p255
        $region50: #{tpu_custom_call.1} parent=43 // pred_check_branch
          %602 = sbr.rel (%p600) target = $region52
        $region51: #{tpu_custom_call.1} parent=43 // pred_region
          %s604 = ssub.s32 16, 16
          %605 = vsyncadd %s583, %s604
          %s606 = sadd.s32 %s32, %s31
          %s607 = smul.addr %s606, 16
          %s608 = scalar_lea.hbm %s7, %s607
          %s610 = sshll.u32 %s585, 4
          %s611 = int_to_ptr.vmem [resolvable:$true] %s610
          %613 = dma.vmem_to_hbm [thread:$0]  %s611, 16, %s608, %s583
        $region52: #{tpu_custom_call.1} parent=43 // pred_fallthru
          _
        // Predicated region
        $region53: #{tpu_custom_call.1} parent=43 // pred_check
          %p614 = pneg %p283
        $region54: #{tpu_custom_call.1} parent=43 // pred_check_branch
          %616 = sbr.rel (%p614) target = $region56
        $region55: #{tpu_custom_call.1} parent=43 // pred_region
          _
        $region56: #{tpu_custom_call.1} parent=43 // pred_fallthru
          _
        // Predicated region
        $region57: #{tpu_custom_call.1} parent=43 // pred_check
          %p617 = pneg %p311
        $region58: #{tpu_custom_call.1} parent=43 // pred_check_branch
          %619 = sbr.rel (%p617) target = $region60
        $region59: #{tpu_custom_call.1} parent=43 // pred_region
          %s621 = ssub.s32 16, 16
          %622 = vsyncadd %s594, %s621
          %s623 = sadd.s32 %s32, %s31
          %s624 = smul.addr %s623, 16
          %s625 = scalar_lea.hbm %s9, %s624
          %s627 = sshll.u32 %s596, 4
          %s628 = int_to_ptr.vmem [resolvable:$true] %s627
          %630 = dma.vmem_to_hbm [thread:$0]  %s628, 16, %s625, %s594
        $region60: #{tpu_custom_call.1} parent=43 // pred_fallthru
          _
      $region44: #{tpu_custom_call.1} parent=5 // pred_fallthru
        _
      %p631 = scmp.le.s32.totalorder 2, %s22
      // Predicated region
      $region61: #{tpu_custom_call.1} parent=5 // pred_check
        %p632 = pneg %p631
      $region62: #{tpu_custom_call.1} parent=5 // pred_check_branch
        %634 = sbr.rel (%p632) target = $region64
      $region63: #{tpu_custom_call.1} parent=5 // pred_region
        %s635 = ssub.s32 %s22, 2
        // Predicated region
        $region65: #{tpu_custom_call.1} parent=63 // pred_check
          %p636 = pneg %p233
        $region66: #{tpu_custom_call.1} parent=63 // pred_check_branch
          %638 = sbr.rel (%p636) target = $region68
        $region67: #{tpu_custom_call.1} parent=63 // pred_region
          %p639 = scmp.lt.s32.totalorder %s33, 1
          %s640 = scalar_select %p639, %s33, 1
          %p641 = scmp.lt.s32.totalorder %s34, 0
          %s642 = scalar_select %p641, %s34, 0
          %s643 = sadd.s32 %s642, %s640
          %s644 = smul.addr %s643, 8
          %s645 = scalar_lea.vmem %s6, %s644
        $region68: #{tpu_custom_call.1} parent=63 // pred_fallthru
          _
        // Predicated region
        $region69: #{tpu_custom_call.1} parent=63 // pred_check
          %p646 = pneg %p261
        $region70: #{tpu_custom_call.1} parent=63 // pred_check_branch
          %648 = sbr.rel (%p646) target = $region72
        $region71: #{tpu_custom_call.1} parent=63 // pred_region
          %s649 = sand.u32 %s246, 1
          %s650 = scalar_lea.sflag [#allocation3], %s649
          %s651 = sand.u32 %s246, 1
          %s652 = scalar_lea.vmem [#allocation2], %s651
          %653 = dma.done %s650, 16
        $region72: #{tpu_custom_call.1} parent=63 // pred_fallthru
          _
        // Predicated region
        $region73: #{tpu_custom_call.1} parent=63 // pred_check
          %p654 = pneg %p289
        $region74: #{tpu_custom_call.1} parent=63 // pred_check_branch
          %656 = sbr.rel (%p654) target = $region76
        $region75: #{tpu_custom_call.1} parent=63 // pred_region
          %p657 = scmp.lt.s32.totalorder %s33, 1
          %s658 = scalar_select %p657, %s33, 1
          %p659 = scmp.lt.s32.totalorder %s34, 0
          %s660 = scalar_select %p659, %s34, 0
          %s661 = sadd.s32 %s660, %s658
          %s662 = smul.addr %s661, 8
          %s663 = scalar_lea.vmem %s8, %s662
        $region76: #{tpu_custom_call.1} parent=63 // pred_fallthru
          _
        // Predicated region
        $region77: #{tpu_custom_call.1} parent=63 // pred_check
          %p664 = pneg %p317
        $region78: #{tpu_custom_call.1} parent=63 // pred_check_branch
          %666 = sbr.rel (%p664) target = $region80
        $region79: #{tpu_custom_call.1} parent=63 // pred_region
          %s667 = sand.u32 %s302, 1
          %s668 = scalar_lea.sflag [#allocation5], %s667
          %s669 = sand.u32 %s302, 1
          %s670 = scalar_lea.vmem [#allocation4], %s669
          %671 = dma.done %s668, 16
        $region80: #{tpu_custom_call.1} parent=63 // pred_fallthru
          _
      $region64: #{tpu_custom_call.1} parent=5 // pred_fallthru
        _
    $region6: #{tpu_custom_call.1} parent=1 // loop_footer
      %s26 = sadd.s32 1, %s22
    $region7: #{tpu_custom_call.1} parent=1 // loop_footer_branch
      %21 = sbr.rel target = $region3
    $region8: #{tpu_custom_call.1} parent=1 // loop_exit
      _
    %672 = vsyncpa [#allocation3], 1
    %s673 = scalar_lea.sflag [#allocation3], 1
    %674 = vsyncpa %s673, 1
    %675 = vsyncpa [#allocation5], 1
    %s676 = scalar_lea.sflag [#allocation5], 1
    %677 = vsyncpa %s676, 1

</llo_original>
